<compile_context>
chip_gen: v6e
topology: v6e:2x2x1
jax: 0.10.0
libtpu: 0.0.40
codegen_flags: <defaults>
</compile_context>

<pallas_src>
import functools
import math

import jax
import jax.numpy as jnp
from jax.experimental import pallas as pl
from jax.experimental.pallas import tpu as pltpu


def _round_up(x, m):
    return ((x + m - 1) // m) * m


def _num_tensorcores():
    """2 TensorCores per chip on v7x, 1 on v5e/v6e."""
    try:
        kind = jax.devices()[0].device_kind.lower()
        if "v7" in kind:
            return 2
    except Exception:
        pass
    return 1


def _qnet_kernel(xt_ref,
                 w1_ref, b1_ref,
                 w2_ref, b2_ref,
                 w3_ref, b3_ref,
                 w4_ref, b4_ref,
                 out_ref):
    """Fused forward for one batch tile, transposed (features, batch) layout.

    xt_ref : (input_dim, tb)  bf16
    wN_ref : (d_out, d_in)    bf16   (PyTorch nn.Linear weight layout)
    bN_ref : (d_out, 1)       f32
    out_ref: (action_num, tb) f32
    """
    x = xt_ref[...]                                                        # bf16

    z1 = jnp.dot(w1_ref[...], x, preferred_element_type=jnp.float32) + b1_ref[...]
    h1 = jnp.maximum(z1, 0.0).astype(jnp.bfloat16)

    z2 = jnp.dot(w2_ref[...], h1, preferred_element_type=jnp.float32) + b2_ref[...]
    h2 = jnp.maximum(z2, 0.0).astype(jnp.bfloat16)

    z3 = jnp.dot(w3_ref[...], h2, preferred_element_type=jnp.float32) + b3_ref[...]
    h3 = jnp.maximum(z3, 0.0).astype(jnp.bfloat16)

    z4 = jnp.dot(w4_ref[...], h3, preferred_element_type=jnp.float32) + b4_ref[...]
    out_ref[...] = z4.astype(out_ref.dtype)


@functools.partial(jax.jit, static_argnames=("batch_tile",))
def qnetwork_forward(x, params, *, batch_tile=None):
    """Pallas implementation of QNetwork.forward.

    x:      (B, input_dim) float32
    params: dict with wN of shape (out, in) and bN of shape (out, 1)
    returns (B, action_num) float32
    """
    B, input_dim = x.shape
    w1, b1 = params["w1"], params["b1"]
    w2, b2 = params["w2"], params["b2"]
    w3, b3 = params["w3"], params["b3"]
    w4, b4 = params["w4"], params["b4"]
    action_num = w4.shape[0]

    # ---- batch-tile policy -------------------------------------------------
    # Big tiles (VMEM is a non-issue at these sizes); single step on v5e/v6e,
    # a multiple of the TensorCore count on v7x for megacore sharding.
    ncores = _num_tensorcores()
    max_tile = 2048
    if batch_tile is None:
        n_steps = max(1, math.ceil(B / max_tile))
        if ncores > 1 and B >= ncores * 128:
            n_steps = _round_up(max(n_steps, ncores), ncores)
        tb = _round_up(math.ceil(B / n_steps), 128)
    else:
        tb = _round_up(max(int(batch_tile), 1), 128)
        n_steps = max(1, math.ceil(B / tb))
    B_pad = n_steps * tb

    # ---- lane-dense transposed layout + bf16 matmul inputs -----------------
    xt = jnp.transpose(x).astype(jnp.bfloat16)                 # (input_dim, B)
    if B_pad != B:
        xt = jnp.pad(xt, ((0, 0), (0, B_pad - B)))
    ws = [w.astype(jnp.bfloat16) for w in (w1, w2, w3, w4)]    # (d_out, d_in)
    bs = [b.astype(jnp.float32) for b in (b1, b2, b3, b4)]     # (d_out, 1)

    def full_spec(a):
        # Full-array block, kept resident in VMEM across all grid steps.
        return pl.BlockSpec(a.shape, lambda i: (0, 0))

    grid_spec = pltpu.PrefetchScalarGridSpec(
        num_scalar_prefetch=0,
        grid=(n_steps,),
        in_specs=[
            pl.BlockSpec((input_dim, tb), lambda i: (0, i)),
            full_spec(ws[0]), full_spec(bs[0]),
            full_spec(ws[1]), full_spec(bs[1]),
            full_spec(ws[2]), full_spec(bs[2]),
            full_spec(ws[3]), full_spec(bs[3]),
        ],
        out_specs=pl.BlockSpec((action_num, tb), lambda i: (0, i)),
    )

    out_t = pl.pallas_call(
        _qnet_kernel,
        out_shape=jax.ShapeDtypeStruct((action_num, B_pad), jnp.float32),
        grid_spec=grid_spec,
        compiler_params=pltpu.CompilerParams(
            dimension_semantics=("parallel",)),
    )(xt, ws[0], bs[0], ws[1], bs[1], ws[2], bs[2], ws[3], bs[3])

    return jnp.transpose(out_t[:, :B])                         # (B, action_num)


def init_qnetwork_params(key, input_dim, h1_dim, h2_dim, h3_dim, action_num):
    """Mirror QNetwork.__init__: xavier_normal_ weights (PyTorch (out,in) layout),
    default nn.Linear uniform bias init."""
    dims = [(input_dim, h1_dim), (h1_dim, h2_dim), (h2_dim, h3_dim), (h3_dim, action_num)]
    params = {}
    for idx, (d_in, d_out) in enumerate(dims, start=1):
        key, kw, kb = jax.random.split(key, 3)
        std = math.sqrt(2.0 / (d_in + d_out))            # xavier_normal_, gain=1
        w = std * jax.random.normal(kw, (d_out, d_in), dtype=jnp.float32)
        bound = 1.0 / math.sqrt(d_in)                    # default nn.Linear bias init
        b = jax.random.uniform(kb, (d_out, 1), dtype=jnp.float32,
                               minval=-bound, maxval=bound)
        params[f"w{idx}"] = w
        params[f"b{idx}"] = b
    return params


def _reference_forward_f32(x, params):
    h = x
    for i in (1, 2, 3):
        h = jnp.maximum(h @ params[f"w{i}"].T + params[f"b{i}"].T, 0.0)
    return h @ params["w4"].T + params["b4"].T


def _reference_forward_bf16(x, params):
    """Same precision recipe as the kernel: bf16 matmul inputs, f32 accumulate."""
    h = x.astype(jnp.bfloat16)
    for i in (1, 2, 3):
        z = jnp.dot(h, params[f"w{i}"].astype(jnp.bfloat16).T,
                    preferred_element_type=jnp.float32) + params[f"b{i}"].T
        h = jnp.maximum(z, 0.0).astype(jnp.bfloat16)
    return jnp.dot(h, params["w4"].astype(jnp.bfloat16).T,
                   preferred_element_type=jnp.float32) + params["b4"].T


if __name__ == "__main__":
    # Small shapes consistent with the module's forward: state is (batch, input_dim).
    batch, input_dim = 256, 32
    h1_dim, h2_dim, h3_dim, action_num = 64, 64, 32, 16

    key = jax.random.PRNGKey(0)
    key, kx = jax.random.split(key)
    x = jax.random.normal(kx, (batch, input_dim), dtype=jnp.float32)
    params = init_qnetwork_params(key, input_dim, h1_dim, h2_dim, h3_dim, action_num)

    q = qnetwork_forward(x, params)
    q = jax.block_until_ready(q)
    assert q.shape == (batch, action_num)

    # Match against a reference using the same bf16-input / f32-accumulate recipe.
    ref_bf16 = _reference_forward_bf16(x, params)
    assert jnp.allclose(q, ref_bf16, atol=1e-2, rtol=1e-2), "mismatch vs bf16 reference"

    # Sanity-check against the full-f32 reference (looser: bf16 rounding error).
    ref_f32 = _reference_forward_f32(x, params)
    assert jnp.allclose(q, ref_f32, atol=1e-1, rtol=1e-1), "mismatch vs f32 reference"

    # TODO(synk): qvalue/qstar/decide_action are trivial gather/max/argmax on the
    # kernel output; implemented outside the kernel if needed.
    print("KERNEL_OK")
</pallas_src>

<mosaic_0001>
module attributes {stable_mosaic.version = 11 : i64} {
  func.func @_qnet_kernel(%arg0: i32, %arg1: memref<32x256xbf16, #tpu.memory_space<vmem>>, %arg2: memref<64x32xbf16, #tpu.memory_space<vmem>>, %arg3: memref<64x1xf32, #tpu.memory_space<vmem>>, %arg4: memref<64x64xbf16, #tpu.memory_space<vmem>>, %arg5: memref<64x1xf32, #tpu.memory_space<vmem>>, %arg6: memref<32x64xbf16, #tpu.memory_space<vmem>>, %arg7: memref<32x1xf32, #tpu.memory_space<vmem>>, %arg8: memref<16x32xbf16, #tpu.memory_space<vmem>>, %arg9: memref<16x1xf32, #tpu.memory_space<vmem>>, %arg10: memref<16x256xf32, #tpu.memory_space<vmem>>) attributes {dimension_semantics = [#tpu.dimension_semantics<parallel>], iteration_bounds = array<i64: 1>, scalar_prefetch = 0 : i64, scratch_operands = 0 : i64, tpu.core_type = #tpu.core_type<tc>, window_params = [{transform_indices = @transform_0, window_bounds = array<i64: 32, 256>}, {pipeline_mode = #tpu.pipeline_mode<synchronous>, transform_indices = @transform_1, window_bounds = array<i64: 64, 32>}, {pipeline_mode = #tpu.pipeline_mode<synchronous>, transform_indices = @transform_2, window_bounds = array<i64: 64, 1>}, {pipeline_mode = #tpu.pipeline_mode<synchronous>, transform_indices = @transform_3, window_bounds = array<i64: 64, 64>}, {pipeline_mode = #tpu.pipeline_mode<synchronous>, transform_indices = @transform_4, window_bounds = array<i64: 64, 1>}, {pipeline_mode = #tpu.pipeline_mode<synchronous>, transform_indices = @transform_5, window_bounds = array<i64: 32, 64>}, {pipeline_mode = #tpu.pipeline_mode<synchronous>, transform_indices = @transform_6, window_bounds = array<i64: 32, 1>}, {pipeline_mode = #tpu.pipeline_mode<synchronous>, transform_indices = @transform_7, window_bounds = array<i64: 16, 32>}, {pipeline_mode = #tpu.pipeline_mode<synchronous>, transform_indices = @transform_8, window_bounds = array<i64: 16, 1>}, {transform_indices = @transform_9, window_bounds = array<i64: 16, 256>}]} {
    %c0 = arith.constant 0 : index
    %c0_0 = arith.constant 0 : index
    %0 = vector.load %arg1[%c0, %c0_0] : memref<32x256xbf16, #tpu.memory_space<vmem>>, vector<32x256xbf16>
    %c0_1 = arith.constant 0 : index
    %c0_2 = arith.constant 0 : index
    %1 = vector.load %arg2[%c0_1, %c0_2] : memref<64x32xbf16, #tpu.memory_space<vmem>>, vector<64x32xbf16>
    %cst = arith.constant dense<0.000000e+00> : vector<64x256xf32>
    %2 = tpu.matmul %1, %0, %cst {dimension_numbers = #tpu.dot_dimension_numbers<[1], [0], [0], [1], [0, 0, 1, 1], [], []>} : vector<64x32xbf16>, vector<32x256xbf16>, vector<64x256xf32> -> vector<64x256xf32>
    %c0_3 = arith.constant 0 : index
    %c0_4 = arith.constant 0 : index
    %3 = vector.load %arg3[%c0_3, %c0_4] : memref<64x1xf32, #tpu.memory_space<vmem>>, vector<64x1xf32>
    %4 = vector.broadcast %3 : vector<64x1xf32> to vector<64x256xf32>
    %5 = arith.addf %2, %4 : vector<64x256xf32>
    %cst_5 = arith.constant 0.000000e+00 : f32
    %6 = vector.broadcast %cst_5 : f32 to vector<64x256xf32>
    %7 = arith.maximumf %5, %6 : vector<64x256xf32>
    %8 = arith.truncf %7 : vector<64x256xf32> to vector<64x256xbf16>
    %c0_6 = arith.constant 0 : index
    %c0_7 = arith.constant 0 : index
    %9 = vector.load %arg4[%c0_6, %c0_7] : memref<64x64xbf16, #tpu.memory_space<vmem>>, vector<64x64xbf16>
    %cst_8 = arith.constant dense<0.000000e+00> : vector<64x256xf32>
    %10 = tpu.matmul %9, %8, %cst_8 {dimension_numbers = #tpu.dot_dimension_numbers<[1], [0], [0], [1], [0, 0, 1, 1], [], []>} : vector<64x64xbf16>, vector<64x256xbf16>, vector<64x256xf32> -> vector<64x256xf32>
    %c0_9 = arith.constant 0 : index
    %c0_10 = arith.constant 0 : index
    %11 = vector.load %arg5[%c0_9, %c0_10] : memref<64x1xf32, #tpu.memory_space<vmem>>, vector<64x1xf32>
    %12 = vector.broadcast %11 : vector<64x1xf32> to vector<64x256xf32>
    %13 = arith.addf %10, %12 : vector<64x256xf32>
    %cst_11 = arith.constant 0.000000e+00 : f32
    %14 = vector.broadcast %cst_11 : f32 to vector<64x256xf32>
    %15 = arith.maximumf %13, %14 : vector<64x256xf32>
    %16 = arith.truncf %15 : vector<64x256xf32> to vector<64x256xbf16>
    %c0_12 = arith.constant 0 : index
    %c0_13 = arith.constant 0 : index
    %17 = vector.load %arg6[%c0_12, %c0_13] : memref<32x64xbf16, #tpu.memory_space<vmem>>, vector<32x64xbf16>
    %cst_14 = arith.constant dense<0.000000e+00> : vector<32x256xf32>
    %18 = tpu.matmul %17, %16, %cst_14 {dimension_numbers = #tpu.dot_dimension_numbers<[1], [0], [0], [1], [0, 0, 1, 1], [], []>} : vector<32x64xbf16>, vector<64x256xbf16>, vector<32x256xf32> -> vector<32x256xf32>
    %c0_15 = arith.constant 0 : index
    %c0_16 = arith.constant 0 : index
    %19 = vector.load %arg7[%c0_15, %c0_16] : memref<32x1xf32, #tpu.memory_space<vmem>>, vector<32x1xf32>
    %20 = vector.broadcast %19 : vector<32x1xf32> to vector<32x256xf32>
    %21 = arith.addf %18, %20 : vector<32x256xf32>
    %cst_17 = arith.constant 0.000000e+00 : f32
    %22 = vector.broadcast %cst_17 : f32 to vector<32x256xf32>
    %23 = arith.maximumf %21, %22 : vector<32x256xf32>
    %24 = arith.truncf %23 : vector<32x256xf32> to vector<32x256xbf16>
    %c0_18 = arith.constant 0 : index
    %c0_19 = arith.constant 0 : index
    %25 = vector.load %arg8[%c0_18, %c0_19] : memref<16x32xbf16, #tpu.memory_space<vmem>>, vector<16x32xbf16>
    %cst_20 = arith.constant dense<0.000000e+00> : vector<16x256xf32>
    %26 = tpu.matmul %25, %24, %cst_20 {dimension_numbers = #tpu.dot_dimension_numbers<[1], [0], [0], [1], [0, 0, 1, 1], [], []>} : vector<16x32xbf16>, vector<32x256xbf16>, vector<16x256xf32> -> vector<16x256xf32>
    %c0_21 = arith.constant 0 : index
    %c0_22 = arith.constant 0 : index
    %27 = vector.load %arg9[%c0_21, %c0_22] : memref<16x1xf32, #tpu.memory_space<vmem>>, vector<16x1xf32>
    %28 = vector.broadcast %27 : vector<16x1xf32> to vector<16x256xf32>
    %29 = arith.addf %26, %28 : vector<16x256xf32>
    %c0_23 = arith.constant 0 : index
    %c0_24 = arith.constant 0 : index
    %30 = vector.load %arg10[%c0_23, %c0_24] : memref<16x256xf32, #tpu.memory_space<vmem>>, vector<16x256xf32>
    tpu.vector_store %arg10[%c0_23, %c0_24], %29 {strides = array<i32>} : memref<16x256xf32, #tpu.memory_space<vmem>>, vector<16x256xf32>,
    return
  }
  func.func @transform_0(%arg0: i32) -> (i32, i32) {
    %c0_i32 = arith.constant 0 : i32
    %c0_i32_0 = arith.constant 0 : i32
    return %c0_i32, %arg0 : i32, i32
  }
  func.func @transform_1(%arg0: i32) -> (i32, i32) {
    %c0_i32 = arith.constant 0 : i32
    %c0_i32_0 = arith.constant 0 : i32
    %c0_i32_1 = arith.constant 0 : i32
    return %c0_i32, %c0_i32_0 : i32, i32
  }
  func.func @transform_2(%arg0: i32) -> (i32, i32) {
    %c0_i32 = arith.constant 0 : i32
    %c0_i32_0 = arith.constant 0 : i32
    %c0_i32_1 = arith.constant 0 : i32
    return %c0_i32, %c0_i32_0 : i32, i32
  }
  func.func @transform_3(%arg0: i32) -> (i32, i32) {
    %c0_i32 = arith.constant 0 : i32
    %c0_i32_0 = arith.constant 0 : i32
    %c0_i32_1 = arith.constant 0 : i32
    return %c0_i32, %c0_i32_0 : i32, i32
  }
  func.func @transform_4(%arg0: i32) -> (i32, i32) {
    %c0_i32 = arith.constant 0 : i32
    %c0_i32_0 = arith.constant 0 : i32
    %c0_i32_1 = arith.constant 0 : i32
    return %c0_i32, %c0_i32_0 : i32, i32
  }
  func.func @transform_5(%arg0: i32) -> (i32, i32) {
    %c0_i32 = arith.constant 0 : i32
    %c0_i32_0 = arith.constant 0 : i32
    %c0_i32_1 = arith.constant 0 : i32
    return %c0_i32, %c0_i32_0 : i32, i32
  }
  func.func @transform_6(%arg0: i32) -> (i32, i32) {
    %c0_i32 = arith.constant 0 : i32
    %c0_i32_0 = arith.constant 0 : i32
    %c0_i32_1 = arith.constant 0 : i32
    return %c0_i32, %c0_i32_0 : i32, i32
  }
  func.func @transform_7(%arg0: i32) -> (i32, i32) {
    %c0_i32 = arith.constant 0 : i32
    %c0_i32_0 = arith.constant 0 : i32
    %c0_i32_1 = arith.constant 0 : i32
    return %c0_i32, %c0_i32_0 : i32, i32
  }
  func.func @transform_8(%arg0: i32) -> (i32, i32) {
    %c0_i32 = arith.constant 0 : i32
    %c0_i32_0 = arith.constant 0 : i32
    %c0_i32_1 = arith.constant 0 : i32
    return %c0_i32, %c0_i32_0 : i32, i32
  }
  func.func @transform_9(%arg0: i32) -> (i32, i32) {
    %c0_i32 = arith.constant 0 : i32
    %c0_i32_0 = arith.constant 0 : i32
    return %c0_i32, %arg0 : i32, i32
  }
}

</mosaic_0001>

<llo_original>
// kernel: qnetwork_forward.1
$region0: #{qnetwork_forward.1}
  #allocation0 [shape = 'u32[]', space=smem, size = 0x4, offset = 0x4, fixed_abs, tag = 'smem constant byte address 0x4 - core index']
  #allocation1 [shape = 'u32[144,128]{1,0:T(1,128)}', space=vmem, size = 0x12000, scoped, tag = 'internal scratch']
  %s0 = inlined_call_operand.vmem [shape: bf16[32,256], index: 0, kind: input, shape index: {}]
  %s1 = inlined_call_operand.vmem [shape: bf16[64,32], index: 1, kind: input, shape index: {}]
  %s2 = inlined_call_operand.vmem [shape: f32[64,1], index: 2, kind: input, shape index: {}]
  %s3 = inlined_call_operand.vmem [shape: bf16[64,64], index: 3, kind: input, shape index: {}]
  %s4 = inlined_call_operand.vmem [shape: f32[64,1], index: 4, kind: input, shape index: {}]
  %s5 = inlined_call_operand.vmem [shape: bf16[32,64], index: 5, kind: input, shape index: {}]
  %s6 = inlined_call_operand.vmem [shape: f32[32,1], index: 6, kind: input, shape index: {}]
  %s7 = inlined_call_operand.vmem [shape: bf16[16,32], index: 7, kind: input, shape index: {}]
  %s8 = inlined_call_operand.vmem [shape: f32[16,1], index: 8, kind: input, shape index: {}]
  %s9 = inlined_call_operand.hbm [shape: f32[16,256], index: 9, kind: output, shape index: {}]
  %s10 = sld [smem:[#allocation0]]
  $region46: #{qnetwork_forward.1} parent=0
    _
  %s12 = ssub.s32 1, %s10
  %s13 = scalar_select 0, %s12, %s10
  $region1: #{qnetwork_forward.1} parent=0
    #allocation2 [shape = 'u8[16384]{0}', space=vmem, size = 0x4000, scoped, tag = 'output window, operand 0, single buffered']
    #allocation3 [shape = 's32[1]{0}', space=sflag, size = 0x4, scoped, tag = 'scoped memory for qnetwork_forward.1']
    %14 = vsyncpa [#allocation3], 0
    // Predicated region
    $region2: #{qnetwork_forward.1} parent=1 // pred_check
      _
    $region3: #{qnetwork_forward.1} parent=1 // pred_check_branch
      %16 = sbr.rel (0) target = $region5
    $region4: #{qnetwork_forward.1} parent=1 // pred_region
      _
    $region5: #{qnetwork_forward.1} parent=1 // pred_fallthru
      _
    // Predicated region
    $region6: #{qnetwork_forward.1} parent=1 // pred_check
      _
    $region7: #{qnetwork_forward.1} parent=1 // pred_check_branch
      %18 = sbr.rel (0) target = $region9
    $region8: #{qnetwork_forward.1} parent=1 // pred_region
      _
    $region9: #{qnetwork_forward.1} parent=1 // pred_fallthru
      _
    // Predicated region
    $region10: #{qnetwork_forward.1} parent=1 // pred_check
      _
    $region11: #{qnetwork_forward.1} parent=1 // pred_check_branch
      %20 = sbr.rel (0) target = $region13
    $region12: #{qnetwork_forward.1} parent=1 // pred_region
      _
    $region13: #{qnetwork_forward.1} parent=1 // pred_fallthru
      _
    // Predicated region
    $region14: #{qnetwork_forward.1} parent=1 // pred_check
      _
    $region15: #{qnetwork_forward.1} parent=1 // pred_check_branch
      %22 = sbr.rel (0) target = $region17
    $region16: #{qnetwork_forward.1} parent=1 // pred_region
      _
    $region17: #{qnetwork_forward.1} parent=1 // pred_fallthru
      _
    // Predicated region
    $region18: #{qnetwork_forward.1} parent=1 // pred_check
      _
    $region19: #{qnetwork_forward.1} parent=1 // pred_check_branch
      %24 = sbr.rel (0) target = $region21
    $region20: #{qnetwork_forward.1} parent=1 // pred_region
      _
    $region21: #{qnetwork_forward.1} parent=1 // pred_fallthru
      _
    // Predicated region
    $region22: #{qnetwork_forward.1} parent=1 // pred_check
      _
    $region23: #{qnetwork_forward.1} parent=1 // pred_check_branch
      %26 = sbr.rel (0) target = $region25
    $region24: #{qnetwork_forward.1} parent=1 // pred_region
      _
    $region25: #{qnetwork_forward.1} parent=1 // pred_fallthru
      _
    // Predicated region
    $region26: #{qnetwork_forward.1} parent=1 // pred_check
      _
    $region27: #{qnetwork_forward.1} parent=1 // pred_check_branch
      %28 = sbr.rel (0) target = $region29
    $region28: #{qnetwork_forward.1} parent=1 // pred_region
      _
    $region29: #{qnetwork_forward.1} parent=1 // pred_fallthru
      _
    // Predicated region
    $region30: #{qnetwork_forward.1} parent=1 // pred_check
      _
    $region31: #{qnetwork_forward.1} parent=1 // pred_check_branch
      %30 = sbr.rel (0) target = $region33
    $region32: #{qnetwork_forward.1} parent=1 // pred_region
      _
    $region33: #{qnetwork_forward.1} parent=1 // pred_fallthru
      _
    // Predicated region
    $region34: #{qnetwork_forward.1} parent=1 // pred_check
      _
    $region35: #{qnetwork_forward.1} parent=1 // pred_check_branch
      %32 = sbr.rel (0) target = $region37
    $region36: #{qnetwork_forward.1} parent=1 // pred_region
      _
    $region37: #{qnetwork_forward.1} parent=1 // pred_fallthru
      _
    %v34 = vld [vmem:[%s0] sm:$0xff]
    %v35 = vld [vmem:[%s0 + $0x8] sm:$0xff]
    %v36 = vld [vmem:[%s0 + $0x10] sm:$0xff]
    %v37 = vld [vmem:[%s0 + $0x18] sm:$0xff]
    %v38 = vld [vmem:[%s1] sm:$0xf]
    %v39 = vld [vmem:[%s1 + $0x4] sm:$0xf]
    %v40 = vld [vmem:[%s1 + $0x8] sm:$0xf]
    %v41 = vld [vmem:[%s1 + $0xc] sm:$0xf]
    %v42 = vld [vmem:[%s1 + $0x10] sm:$0xf]
    %v43 = vld [vmem:[%s1 + $0x14] sm:$0xf]
    %v44 = vld [vmem:[%s1 + $0x18] sm:$0xf]
    %v45 = vld [vmem:[%s1 + $0x1c] sm:$0xf]
    %v46 = vld [vmem:[%s2] sm:$0xff]
    %v47 = vld [vmem:[%s2 + $0x8] sm:$0xff]
    %v48 = vld [vmem:[%s2 + $0x10] sm:$0xff]
    %v49 = vld [vmem:[%s2 + $0x18] sm:$0xff]
    %v50 = vld [vmem:[%s2 + $0x20] sm:$0xff]
    %v51 = vld [vmem:[%s2 + $0x28] sm:$0xff]
    %v52 = vld [vmem:[%s2 + $0x30] sm:$0xff]
    %v53 = vld [vmem:[%s2 + $0x38] sm:$0xff]
    %55 = vset.pattern.permute.xlu0 0
    %56 = vperm.xlu0 %55, %v46
    %v57 = vpop.permute.xlu0 %56
    %60 = vset.pattern.permute.xlu0 0
    %61 = vperm.xlu0 %60, %v47
    %v62 = vpop.permute.xlu0 %61
    %65 = vset.pattern.permute.xlu0 0
    %66 = vperm.xlu0 %65, %v48
    %v67 = vpop.permute.xlu0 %66
    %70 = vset.pattern.permute.xlu0 0
    %71 = vperm.xlu0 %70, %v49
    %v72 = vpop.permute.xlu0 %71
    %75 = vset.pattern.permute.xlu0 0
    %76 = vperm.xlu0 %75, %v50
    %v77 = vpop.permute.xlu0 %76
    %80 = vset.pattern.permute.xlu0 0
    %81 = vperm.xlu0 %80, %v51
    %v82 = vpop.permute.xlu0 %81
    %85 = vset.pattern.permute.xlu0 0
    %86 = vperm.xlu0 %85, %v52
    %v87 = vpop.permute.xlu0 %86
    %90 = vset.pattern.permute.xlu0 0
    %91 = vperm.xlu0 %90, %v53
    %v92 = vpop.permute.xlu0 %91
    %v102 = vunpack.c.l.b16 %v38
    %v103 = vunpack.c.l.b16 %v39
    %v104 = vunpack.c.l.b16 %v40
    %v105 = vunpack.c.l.b16 %v41
    %v106 = vunpack.c.l.b16 %v42
    %v107 = vunpack.c.l.b16 %v43
    %v108 = vunpack.c.l.b16 %v44
    %v109 = vunpack.c.l.b16 %v45
    %v110 = vpack.c.b16 %v103, %v102
    %v111 = vpack.c.b16 %v105, %v104
    %v112 = vpack.c.b16 %v107, %v106
    %v113 = vpack.c.b16 %v109, %v108
    %v118 = vunpack.c.l.b16 %v34
    %v119 = vunpack.c.h.b16 %v34
    %v120 = vunpack.c.l.b16 %v35
    %v121 = vunpack.c.h.b16 %v35
    %v122 = vunpack.c.l.b16 %v36
    %v123 = vunpack.c.h.b16 %v36
    %v124 = vunpack.c.l.b16 %v37
    %v125 = vunpack.c.h.b16 %v37
    %v126 = vpack.c.b16 %v120, %v118
    %v127 = vpack.c.b16 %v121, %v119
    %v128 = vpack.c.b16 %v124, %v122
    %v129 = vpack.c.b16 %v125, %v123
    %vm134 = vcmask 261120
    %v136 = vsel %vm134, %v110, 0
    %v139 = vsel %vm134, %v111, 0
    %v142 = vsel %vm134, %v112, 0
    %v145 = vsel %vm134, %v113, 0
    %147 = vmatprep.subr.bf16.mxu0 0
    %148 = vmatpush1.bf16.msra.mxu0 0
    %149 = vmatprep.subr.bf16.mxu0 0
    %150 = vmatpush1.bf16.msra.mxu0 0
    %151 = vmatprep.subr.bf16.mxu0 0
    %152 = vmatpush1.bf16.msra.mxu0 0
    %153 = vmatprep.subr.bf16.mxu0 0
    %154 = vmatpush1.bf16.msra.mxu0 0
    %155 = vmatprep.subr.bf16.mxu0 0
    %156 = vmatpush1.bf16.msra.mxu0 0
    %157 = vmatprep.subr.bf16.mxu0 0
    %158 = vmatpush1.bf16.msra.mxu0 0
    %159 = vmatprep.subr.bf16.mxu0 %v129
    %160 = vmatpush1.bf16.msra.mxu0 %v128
    %161 = vmatprep.subr.bf16.mxu0 %v127
    %162 = vmatpush1.bf16.msra.mxu0 %v126
    %163 = vmatprep.subr.bf16.mxu0 0
    %164 = vmatpush2.bf16.msra.mxu0 0
    %165 = vmatprep.subr.bf16.mxu0 0
    %166 = vmatpush2.bf16.msra.mxu0 0
    %167 = vmatprep.subr.bf16.mxu0 0
    %168 = vmatpush2.bf16.msra.mxu0 0
    %169 = vmatprep.subr.bf16.mxu0 0
    %170 = vmatpush2.bf16.msra.mxu0 0
    %171 = vmatprep.subr.bf16.mxu0 0
    %172 = vmatpush2.bf16.msra.mxu0 0
    %173 = vmatprep.subr.bf16.mxu0 0
    %174 = vmatpush2.bf16.msra.mxu0 0
    %175 = vmatprep.subr.bf16.mxu0 0
    %176 = vmatpush2.bf16.msra.mxu0 0
    %177 = vmatprep.subr.bf16.mxu0 0
    %178 = vmatpush2.bf16.msra.mxu0 0
    %179 = vmatprep.mubr.bf16.mxu0 0
    %180 = vmatmul.mubr.bf16.gmra.mxu0 %v136
    %v181 = vpop.f32.mrf.mxu0
    %v182 = vadd.f32 %v57, %v181
    %v183 = vpop.f32.mrf.mxu0
    %v184 = vadd.f32 %v57, %v183
    %v185 = vpop.f32.mrf.mxu0
    %v186 = vadd.f32 %v62, %v185
    %v187 = vpop.f32.mrf.mxu0
    %v188 = vadd.f32 %v62, %v187
    %189 = vmatprep.mubr.bf16.mxu0 0
    %190 = vmatmul.mubr.bf16.gmra.mxu0 %v139
    %v191 = vpop.f32.mrf.mxu0
    %v192 = vadd.f32 %v67, %v191
    %v193 = vpop.f32.mrf.mxu0
    %v194 = vadd.f32 %v67, %v193
    %v195 = vpop.f32.mrf.mxu0
    %v196 = vadd.f32 %v72, %v195
    %v197 = vpop.f32.mrf.mxu0
    %v198 = vadd.f32 %v72, %v197
    %199 = vmatprep.mubr.bf16.mxu0 0
    %200 = vmatmul.mubr.bf16.gmra.mxu0 %v142
    %v201 = vpop.f32.mrf.mxu0
    %v202 = vadd.f32 %v77, %v201
    %v203 = vpop.f32.mrf.mxu0
    %v204 = vadd.f32 %v77, %v203
    %v205 = vpop.f32.mrf.mxu0
    %v206 = vadd.f32 %v82, %v205
    %v207 = vpop.f32.mrf.mxu0
    %v208 = vadd.f32 %v82, %v207
    %209 = vmatprep.mubr.bf16.mxu0 0
    %210 = vmatmul.mubr.bf16.gmra.mxu0 %v145
    %v211 = vpop.f32.mrf.mxu0
    %v212 = vadd.f32 %v87, %v211
    %v213 = vpop.f32.mrf.mxu0
    %v214 = vadd.f32 %v87, %v213
    %v215 = vpop.f32.mrf.mxu0
    %v216 = vadd.f32 %v92, %v215
    %v217 = vpop.f32.mrf.mxu0
    %v218 = vadd.f32 %v92, %v217
    %219 = vdwg.mxu0
    %v220 = vmax.f32 %v182, 0.0
    %v221 = vmax.f32 %v184, 0.0
    %v222 = vmax.f32 %v186, 0.0
    %v223 = vmax.f32 %v188, 0.0
    %v224 = vmax.f32 %v192, 0.0
    %v225 = vmax.f32 %v194, 0.0
    %v226 = vmax.f32 %v196, 0.0
    %v227 = vmax.f32 %v198, 0.0
    %v228 = vmax.f32 %v202, 0.0
    %v229 = vmax.f32 %v204, 0.0
    %v230 = vmax.f32 %v206, 0.0
    %v231 = vmax.f32 %v208, 0.0
    %v232 = vmax.f32 %v212, 0.0
    %v233 = vmax.f32 %v214, 0.0
    %v234 = vmax.f32 %v216, 0.0
    %v235 = vmax.f32 %v218, 0.0
    %v236 = vpack.c.bf16 %v222, %v220
    %v237 = vpack.c.bf16 %v223, %v221
    %v238 = vpack.c.bf16 %v226, %v224
    %v239 = vpack.c.bf16 %v227, %v225
    %v240 = vpack.c.bf16 %v230, %v228
    %v241 = vpack.c.bf16 %v231, %v229
    %v242 = vpack.c.bf16 %v234, %v232
    %v243 = vpack.c.bf16 %v235, %v233
    %v244 = vld [vmem:[%s3] sm:$0xf]
    %v245 = vld [vmem:[%s3 + $0x4] sm:$0xf]
    %v246 = vld [vmem:[%s3 + $0x8] sm:$0xf]
    %v247 = vld [vmem:[%s3 + $0xc] sm:$0xf]
    %v248 = vld [vmem:[%s3 + $0x10] sm:$0xf]
    %v249 = vld [vmem:[%s3 + $0x14] sm:$0xf]
    %v250 = vld [vmem:[%s3 + $0x18] sm:$0xf]
    %v251 = vld [vmem:[%s3 + $0x1c] sm:$0xf]
    %v252 = vld [vmem:[%s4] sm:$0xff]
    %v253 = vld [vmem:[%s4 + $0x8] sm:$0xff]
    %v254 = vld [vmem:[%s4 + $0x10] sm:$0xff]
    %v255 = vld [vmem:[%s4 + $0x18] sm:$0xff]
    %v256 = vld [vmem:[%s4 + $0x20] sm:$0xff]
    %v257 = vld [vmem:[%s4 + $0x28] sm:$0xff]
    %v258 = vld [vmem:[%s4 + $0x30] sm:$0xff]
    %v259 = vld [vmem:[%s4 + $0x38] sm:$0xff]
    %261 = vset.pattern.permute.xlu0 0
    %262 = vperm.xlu0 %261, %v252
    %v263 = vpop.permute.xlu0 %262
    %266 = vset.pattern.permute.xlu0 0
    %267 = vperm.xlu0 %266, %v253
    %v268 = vpop.permute.xlu0 %267
    %271 = vset.pattern.permute.xlu0 0
    %272 = vperm.xlu0 %271, %v254
    %v273 = vpop.permute.xlu0 %272
    %276 = vset.pattern.permute.xlu0 0
    %277 = vperm.xlu0 %276, %v255
    %v278 = vpop.permute.xlu0 %277
    %281 = vset.pattern.permute.xlu0 0
    %282 = vperm.xlu0 %281, %v256
    %v283 = vpop.permute.xlu0 %282
    %286 = vset.pattern.permute.xlu0 0
    %287 = vperm.xlu0 %286, %v257
    %v288 = vpop.permute.xlu0 %287
    %291 = vset.pattern.permute.xlu0 0
    %292 = vperm.xlu0 %291, %v258
    %v293 = vpop.permute.xlu0 %292
    %296 = vset.pattern.permute.xlu0 0
    %297 = vperm.xlu0 %296, %v259
    %v298 = vpop.permute.xlu0 %297
    %v308 = vunpack.c.l.b16 %v244
    %v309 = vunpack.c.l.b16 %v245
    %v310 = vunpack.c.l.b16 %v246
    %v311 = vunpack.c.l.b16 %v247
    %v312 = vunpack.c.l.b16 %v248
    %v313 = vunpack.c.l.b16 %v249
    %v314 = vunpack.c.l.b16 %v250
    %v315 = vunpack.c.l.b16 %v251
    %v316 = vpack.c.b16 %v309, %v308
    %v317 = vpack.c.b16 %v311, %v310
    %v318 = vpack.c.b16 %v313, %v312
    %v319 = vpack.c.b16 %v315, %v314
    %vm320 = vcmask 523264
    %v322 = vsel %vm320, %v316, 0
    %v325 = vsel %vm320, %v317, 0
    %v328 = vsel %vm320, %v318, 0
    %v331 = vsel %vm320, %v319, 0
    %333 = vmatprep.subr.bf16.mxu0 0
    %334 = vmatpush1.bf16.msra.mxu0 0
    %335 = vmatprep.subr.bf16.mxu0 0
    %336 = vmatpush1.bf16.msra.mxu0 0
    %337 = vmatprep.subr.bf16.mxu0 0
    %338 = vmatpush1.bf16.msra.mxu0 0
    %339 = vmatprep.subr.bf16.mxu0 0
    %340 = vmatpush1.bf16.msra.mxu0 0
    %341 = vmatprep.subr.bf16.mxu0 %v243
    %342 = vmatpush1.bf16.msra.mxu0 %v242
    %343 = vmatprep.subr.bf16.mxu0 %v241
    %344 = vmatpush1.bf16.msra.mxu0 %v240
    %345 = vmatprep.subr.bf16.mxu0 %v239
    %346 = vmatpush1.bf16.msra.mxu0 %v238
    %347 = vmatprep.subr.bf16.mxu0 %v237
    %348 = vmatpush1.bf16.msra.mxu0 %v236
    %349 = vmatprep.subr.bf16.mxu0 0
    %350 = vmatpush2.bf16.msra.mxu0 0
    %351 = vmatprep.subr.bf16.mxu0 0
    %352 = vmatpush2.bf16.msra.mxu0 0
    %353 = vmatprep.subr.bf16.mxu0 0
    %354 = vmatpush2.bf16.msra.mxu0 0
    %355 = vmatprep.subr.bf16.mxu0 0
    %356 = vmatpush2.bf16.msra.mxu0 0
    %357 = vmatprep.subr.bf16.mxu0 0
    %358 = vmatpush2.bf16.msra.mxu0 0
    %359 = vmatprep.subr.bf16.mxu0 0
    %360 = vmatpush2.bf16.msra.mxu0 0
    %361 = vmatprep.subr.bf16.mxu0 0
    %362 = vmatpush2.bf16.msra.mxu0 0
    %363 = vmatprep.subr.bf16.mxu0 0
    %364 = vmatpush2.bf16.msra.mxu0 0
    %365 = vmatprep.mubr.bf16.mxu0 0
    %366 = vmatmul.mubr.bf16.gmra.mxu0 %v322
    %v367 = vpop.f32.mrf.mxu0
    %v368 = vadd.f32 %v263, %v367
    %v369 = vpop.f32.mrf.mxu0
    %v370 = vadd.f32 %v263, %v369
    %v371 = vpop.f32.mrf.mxu0
    %v372 = vadd.f32 %v268, %v371
    %v373 = vpop.f32.mrf.mxu0
    %v374 = vadd.f32 %v268, %v373
    %375 = vmatprep.mubr.bf16.mxu0 0
    %376 = vmatmul.mubr.bf16.gmra.mxu0 %v325
    %v377 = vpop.f32.mrf.mxu0
    %v378 = vadd.f32 %v273, %v377
    %v379 = vpop.f32.mrf.mxu0
    %v380 = vadd.f32 %v273, %v379
    %v381 = vpop.f32.mrf.mxu0
    %v382 = vadd.f32 %v278, %v381
    %v383 = vpop.f32.mrf.mxu0
    %v384 = vadd.f32 %v278, %v383
    %385 = vmatprep.mubr.bf16.mxu0 0
    %386 = vmatmul.mubr.bf16.gmra.mxu0 %v328
    %v387 = vpop.f32.mrf.mxu0
    %v388 = vadd.f32 %v283, %v387
    %v389 = vpop.f32.mrf.mxu0
    %v390 = vadd.f32 %v283, %v389
    %v391 = vpop.f32.mrf.mxu0
    %v392 = vadd.f32 %v288, %v391
    %v393 = vpop.f32.mrf.mxu0
    %v394 = vadd.f32 %v288, %v393
    %395 = vmatprep.mubr.bf16.mxu0 0
    %396 = vmatmul.mubr.bf16.gmra.mxu0 %v331
    %v397 = vpop.f32.mrf.mxu0
    %v398 = vadd.f32 %v293, %v397
    %v399 = vpop.f32.mrf.mxu0
    %v400 = vadd.f32 %v293, %v399
    %v401 = vpop.f32.mrf.mxu0
    %v402 = vadd.f32 %v298, %v401
    %v403 = vpop.f32.mrf.mxu0
    %v404 = vadd.f32 %v298, %v403
    %405 = vdwg.mxu0
    %v406 = vmax.f32 %v368, 0.0
    %v407 = vmax.f32 %v370, 0.0
    %v408 = vmax.f32 %v372, 0.0
    %v409 = vmax.f32 %v374, 0.0
    %v410 = vmax.f32 %v378, 0.0
    %v411 = vmax.f32 %v380, 0.0
    %v412 = vmax.f32 %v382, 0.0
    %v413 = vmax.f32 %v384, 0.0
    %v414 = vmax.f32 %v388, 0.0
    %v415 = vmax.f32 %v390, 0.0
    %v416 = vmax.f32 %v392, 0.0
    %v417 = vmax.f32 %v394, 0.0
    %v418 = vmax.f32 %v398, 0.0
    %v419 = vmax.f32 %v400, 0.0
    %v420 = vmax.f32 %v402, 0.0
    %v421 = vmax.f32 %v404, 0.0
    %v422 = vpack.c.bf16 %v408, %v406
    %v423 = vpack.c.bf16 %v409, %v407
    %v424 = vpack.c.bf16 %v412, %v410
    %v425 = vpack.c.bf16 %v413, %v411
    %v426 = vpack.c.bf16 %v416, %v414
    %v427 = vpack.c.bf16 %v417, %v415
    %v428 = vpack.c.bf16 %v420, %v418
    %v429 = vpack.c.bf16 %v421, %v419
    %v430 = vld [vmem:[%s5] sm:$0xf]
    %v431 = vld [vmem:[%s5 + $0x4] sm:$0xf]
    %v432 = vld [vmem:[%s5 + $0x8] sm:$0xf]
    %v433 = vld [vmem:[%s5 + $0xc] sm:$0xf]
    %v434 = vld [vmem:[%s6] sm:$0xff]
    %v435 = vld [vmem:[%s6 + $0x8] sm:$0xff]
    %v436 = vld [vmem:[%s6 + $0x10] sm:$0xff]
    %v437 = vld [vmem:[%s6 + $0x18] sm:$0xff]
    %439 = vset.pattern.permute.xlu0 0
    %440 = vperm.xlu0 %439, %v434
    %v441 = vpop.permute.xlu0 %440
    %444 = vset.pattern.permute.xlu0 0
    %445 = vperm.xlu0 %444, %v435
    %v446 = vpop.permute.xlu0 %445
    %449 = vset.pattern.permute.xlu0 0
    %450 = vperm.xlu0 %449, %v436
    %v451 = vpop.permute.xlu0 %450
    %454 = vset.pattern.permute.xlu0 0
    %455 = vperm.xlu0 %454, %v437
    %v456 = vpop.permute.xlu0 %455
    %v462 = vunpack.c.l.b16 %v430
    %v463 = vunpack.c.l.b16 %v431
    %v464 = vunpack.c.l.b16 %v432
    %v465 = vunpack.c.l.b16 %v433
    %v466 = vpack.c.b16 %v463, %v462
    %v467 = vpack.c.b16 %v465, %v464
    %v469 = vsel %vm320, %v466, 0
    %v472 = vsel %vm320, %v467, 0
    %474 = vmatprep.subr.bf16.mxu0 0
    %475 = vmatpush1.bf16.msra.mxu0 0
    %476 = vmatprep.subr.bf16.mxu0 0
    %477 = vmatpush1.bf16.msra.mxu0 0
    %478 = vmatprep.subr.bf16.mxu0 0
    %479 = vmatpush1.bf16.msra.mxu0 0
    %480 = vmatprep.subr.bf16.mxu0 0
    %481 = vmatpush1.bf16.msra.mxu0 0
    %482 = vmatprep.subr.bf16.mxu0 %v429
    %483 = vmatpush1.bf16.msra.mxu0 %v428
    %484 = vmatprep.subr.bf16.mxu0 %v427
    %485 = vmatpush1.bf16.msra.mxu0 %v426
    %486 = vmatprep.subr.bf16.mxu0 %v425
    %487 = vmatpush1.bf16.msra.mxu0 %v424
    %488 = vmatprep.subr.bf16.mxu0 %v423
    %489 = vmatpush1.bf16.msra.mxu0 %v422
    %490 = vmatprep.subr.bf16.mxu0 0
    %491 = vmatpush2.bf16.msra.mxu0 0
    %492 = vmatprep.subr.bf16.mxu0 0
    %493 = vmatpush2.bf16.msra.mxu0 0
    %494 = vmatprep.subr.bf16.mxu0 0
    %495 = vmatpush2.bf16.msra.mxu0 0
    %496 = vmatprep.subr.bf16.mxu0 0
    %497 = vmatpush2.bf16.msra.mxu0 0
    %498 = vmatprep.subr.bf16.mxu0 0
    %499 = vmatpush2.bf16.msra.mxu0 0
    %500 = vmatprep.subr.bf16.mxu0 0
    %501 = vmatpush2.bf16.msra.mxu0 0
    %502 = vmatprep.subr.bf16.mxu0 0
    %503 = vmatpush2.bf16.msra.mxu0 0
    %504 = vmatprep.subr.bf16.mxu0 0
    %505 = vmatpush2.bf16.msra.mxu0 0
    %506 = vmatprep.mubr.bf16.mxu0 0
    %507 = vmatmul.mubr.bf16.gmra.mxu0 %v469
    %v508 = vpop.f32.mrf.mxu0
    %v509 = vadd.f32 %v441, %v508
    %v510 = vpop.f32.mrf.mxu0
    %v511 = vadd.f32 %v441, %v510
    %v512 = vpop.f32.mrf.mxu0
    %v513 = vadd.f32 %v446, %v512
    %v514 = vpop.f32.mrf.mxu0
    %v515 = vadd.f32 %v446, %v514
    %516 = vmatprep.mubr.bf16.mxu0 0
    %517 = vmatmul.mubr.bf16.gmra.mxu0 %v472
    %v518 = vpop.f32.mrf.mxu0
    %v519 = vadd.f32 %v451, %v518
    %v520 = vpop.f32.mrf.mxu0
    %v521 = vadd.f32 %v451, %v520
    %v522 = vpop.f32.mrf.mxu0
    %v523 = vadd.f32 %v456, %v522
    %v524 = vpop.f32.mrf.mxu0
    %v525 = vadd.f32 %v456, %v524
    %526 = vdwg.mxu0
    %v527 = vmax.f32 %v509, 0.0
    %v528 = vmax.f32 %v511, 0.0
    %v529 = vmax.f32 %v513, 0.0
    %v530 = vmax.f32 %v515, 0.0
    %v531 = vmax.f32 %v519, 0.0
    %v532 = vmax.f32 %v521, 0.0
    %v533 = vmax.f32 %v523, 0.0
    %v534 = vmax.f32 %v525, 0.0
    %v535 = vpack.c.bf16 %v529, %v527
    %v536 = vpack.c.bf16 %v530, %v528
    %v537 = vpack.c.bf16 %v533, %v531
    %v538 = vpack.c.bf16 %v534, %v532
    %v539 = vld [vmem:[%s7] sm:$0xf]
    %v540 = vld [vmem:[%s7 + $0x4] sm:$0xf]
    %v541 = vld [vmem:[%s8] sm:$0xff]
    %v542 = vld [vmem:[%s8 + $0x8] sm:$0xff]
    %544 = vset.pattern.permute.xlu0 0
    %545 = vperm.xlu0 %544, %v541
    %v546 = vpop.permute.xlu0 %545
    %549 = vset.pattern.permute.xlu0 0
    %550 = vperm.xlu0 %549, %v542
    %v551 = vpop.permute.xlu0 %550
    %v555 = vunpack.c.l.b16 %v539
    %v556 = vunpack.c.l.b16 %v540
    %v557 = vpack.c.b16 %v556, %v555
    %v559 = vsel %vm134, %v557, 0
    %561 = vmatprep.subr.bf16.mxu0 0
    %562 = vmatpush1.bf16.msra.mxu0 0
    %563 = vmatprep.subr.bf16.mxu0 0
    %564 = vmatpush1.bf16.msra.mxu0 0
    %565 = vmatprep.subr.bf16.mxu0 0
    %566 = vmatpush1.bf16.msra.mxu0 0
    %567 = vmatprep.subr.bf16.mxu0 0
    %568 = vmatpush1.bf16.msra.mxu0 0
    %569 = vmatprep.subr.bf16.mxu0 0
    %570 = vmatpush1.bf16.msra.mxu0 0
    %571 = vmatprep.subr.bf16.mxu0 0
    %572 = vmatpush1.bf16.msra.mxu0 0
    %573 = vmatprep.subr.bf16.mxu0 %v538
    %574 = vmatpush1.bf16.msra.mxu0 %v537
    %575 = vmatprep.subr.bf16.mxu0 %v536
    %576 = vmatpush1.bf16.msra.mxu0 %v535
    %577 = vmatprep.subr.bf16.mxu0 0
    %578 = vmatpush2.bf16.msra.mxu0 0
    %579 = vmatprep.subr.bf16.mxu0 0
    %580 = vmatpush2.bf16.msra.mxu0 0
    %581 = vmatprep.subr.bf16.mxu0 0
    %582 = vmatpush2.bf16.msra.mxu0 0
    %583 = vmatprep.subr.bf16.mxu0 0
    %584 = vmatpush2.bf16.msra.mxu0 0
    %585 = vmatprep.subr.bf16.mxu0 0
    %586 = vmatpush2.bf16.msra.mxu0 0
    %587 = vmatprep.subr.bf16.mxu0 0
    %588 = vmatpush2.bf16.msra.mxu0 0
    %589 = vmatprep.subr.bf16.mxu0 0
    %590 = vmatpush2.bf16.msra.mxu0 0
    %591 = vmatprep.subr.bf16.mxu0 0
    %592 = vmatpush2.bf16.msra.mxu0 0
    %593 = vmatprep.mubr.bf16.mxu0 0
    %594 = vmatmul.mubr.bf16.gmra.mxu0 %v559
    %v595 = vpop.f32.mrf.mxu0
    %v596 = vadd.f32 %v546, %v595
    %v597 = vpop.f32.mrf.mxu0
    %v598 = vadd.f32 %v546, %v597
    %v599 = vpop.f32.mrf.mxu0
    %v600 = vadd.f32 %v551, %v599
    %v601 = vpop.f32.mrf.mxu0
    %v602 = vadd.f32 %v551, %v601
    %603 = vdwg.mxu0
    %604 = vst [vmem:[#allocation2] sm:$0xff] %v596
    %605 = vst [vmem:[#allocation2 + $0x8] sm:$0xff] %v598
    %606 = vst [vmem:[#allocation2 + $0x10] sm:$0xff] %v600
    %607 = vst [vmem:[#allocation2 + $0x18] sm:$0xff] %v602
    // Predicated region
    $region38: #{qnetwork_forward.1} parent=1 // pred_check
      _
    $region39: #{qnetwork_forward.1} parent=1 // pred_check_branch
      %609 = sbr.rel (0) target = $region41
    $region40: #{qnetwork_forward.1} parent=1 // pred_region
      %s611 = ssub.s32 512, 512
      %612 = vsyncadd [#allocation3], %s611
      %s613 = sshll.u32 [#allocation2], 4
      %s614 = int_to_ptr.vmem [resolvable:$true] %s613
      %619 = dma.vmem_to_hbm [thread:$0]  %s614, 512, %s9, [#allocation3], 256, 256, 16
    $region41: #{qnetwork_forward.1} parent=1 // pred_fallthru
      _
    // Predicated region
    $region42: #{qnetwork_forward.1} parent=1 // pred_check
      _
    $region43: #{qnetwork_forward.1} parent=1 // pred_check_branch
      %621 = sbr.rel (0) target = $region45
    $region44: #{qnetwork_forward.1} parent=1 // pred_region
      %622 = dma.done [#allocation3], 512
    $region45: #{qnetwork_forward.1} parent=1 // pred_fallthru
      _
    %623 = vsyncpa [#allocation3], 1

</llo_original>
